<compile_context>
chip_gen: v7x
topology: tpu7x:2x2x1
jax: 0.10.0
libtpu: 0.0.40
codegen_flags: <defaults>
</compile_context>

<pallas_src>
import jax
import jax.numpy as jnp
from jax.experimental import pallas as pl
from jax.experimental.pallas import tpu as pltpu


def _round_up(n, m):
    return ((n + m - 1) // m) * m


def _mlp_kernel(xT_ref, w1a_ref, w1b_ref, b1_ref, w2_ref, b2_ref, w3_ref, b3_ref,
                o_ref):
    xT = xT_ref[...]                                   # (2, TILE_B), batch on lanes
    x0 = xT[0:1, :]                                    # (1, TILE_B)
    x1 = xT[1:2, :]                                    # (1, TILE_B)

    # fc1 (in=2) as broadcast FMAs on the VPU: a K=2 contraction would use <2%
    # of the MXU and still pay push/pop latency.
    h1 = w1a_ref[...] * x0 + w1b_ref[...] * x1 + b1_ref[...]   # (10, TILE_B)
    h1 = jnp.maximum(h1, 0.0)

    # fc2 (10x10) on the MXU, batch stays on lanes.
    h2 = jnp.dot(w2_ref[...], h1, preferred_element_type=jnp.float32) + b2_ref[...]
    # sigmoid via a single EUP tanh instead of exp + true divide.
    h2 = 0.5 * jnp.tanh(0.5 * h2) + 0.5                         # (10, TILE_B)

    # fc3 (out=1) as elementwise multiply + sublane reduction (XLU slot),
    # keeping the MXU / result FIFO out of the critical path.
    h3 = jnp.sum(w3_ref[...] * h2, axis=0, keepdims=True) + b3_ref[...]  # (1, TILE_B)
    o_ref[...] = 0.5 * jnp.tanh(0.5 * h3) + 0.5                 # lane-dense store


def pack_params(p):
    """Convert PyTorch-layout params into the kernel's (features, batch) layout.

    Call once and reuse for hot-loop inference (keeps per-call reshapes out of
    the forward path).
    """
    return {
        "w1a": p["fc1_w"][:, 0:1],            # (10, 1)  column 0 of fc1.weight
        "w1b": p["fc1_w"][:, 1:2],            # (10, 1)  column 1 of fc1.weight
        "b1":  p["fc1_b"].reshape(10, 1),     # (10, 1)
        "w2":  p["fc2_w"],                    # (10, 10) used as W2 @ h1
        "b2":  p["fc2_b"].reshape(10, 1),     # (10, 1)
        "w3":  p["fc3_w"].T,                  # (10, 1)  = fc3.weight^T
        "b3":  p["fc3_b"].reshape(1, 1),      # (1, 1)
    }


def xor_net_forward(x, kp, tile_b=8192):
    """Fused forward pass.

    Args:
      x:  (B, 2) float32 input.
      kp: packed params from pack_params().
      tile_b: max batch tile (lanes) per grid step; sized to fit comfortably in
              VMEM on v5e/v6e (128 MiB) and v7x (64 MiB) with double buffering.
    Returns:
      (B, 1) float32 output (matches PyTorch Net.forward).
    """
    B = x.shape[0]
    tb = min(tile_b, _round_up(B, 128))        # lane dim must be a multiple of 128
    B_pad = _round_up(B, tb)

    xT = jnp.transpose(x)                      # (2, B): batch -> lanes
    if B_pad != B:
        xT = jnp.pad(xT, ((0, 0), (0, B_pad - B)))

    const = lambda i: (0, 0)                   # weights resident across grid steps
    out = pl.pallas_call(
        _mlp_kernel,
        out_shape=jax.ShapeDtypeStruct((1, B_pad), jnp.float32),
        grid=(B_pad // tb,),
        in_specs=[
            pl.BlockSpec((2, tb), lambda i: (0, i)),    # x^T tile (pipelined)
            pl.BlockSpec((10, 1), const),               # w1 col 0
            pl.BlockSpec((10, 1), const),               # w1 col 1
            pl.BlockSpec((10, 1), const),               # b1
            pl.BlockSpec((10, 10), const),              # w2
            pl.BlockSpec((10, 1), const),               # b2
            pl.BlockSpec((10, 1), const),               # w3^T
            pl.BlockSpec((1, 1), const),                # b3
        ],
        out_specs=pl.BlockSpec((1, tb), lambda i: (0, i)),   # lane-dense output
        compiler_params=pltpu.CompilerParams(
            dimension_semantics=("parallel",),
        ),
    )(xT, kp["w1a"], kp["w1b"], kp["b1"], kp["w2"], kp["b2"], kp["w3"], kp["b3"])

    return out[:, :B].T                        # (B, 1)


def init_params(key):
    """Deterministic init in PyTorch Linear layout (fc1 2->10, fc2 10->10, fc3 10->1)."""
    k1, k2, k3, k4, k5, k6 = jax.random.split(key, 6)
    return {
        "fc1_w": jax.random.uniform(k1, (10, 2), jnp.float32, -0.5, 0.5),
        "fc1_b": jax.random.uniform(k2, (10,), jnp.float32, -0.5, 0.5),
        "fc2_w": jax.random.uniform(k3, (10, 10), jnp.float32, -0.3, 0.3),
        "fc2_b": jax.random.uniform(k4, (10,), jnp.float32, -0.3, 0.3),
        "fc3_w": jax.random.uniform(k5, (1, 10), jnp.float32, -0.3, 0.3),
        "fc3_b": jax.random.uniform(k6, (1,), jnp.float32, -0.3, 0.3),
    }


def _reference_forward(x, p):
    """Pure-JAX reference (PyTorch semantics: y = x @ W.T + b)."""
    h1 = jnp.maximum(x @ p["fc1_w"].T + p["fc1_b"], 0.0)
    h2 = jax.nn.sigmoid(h1 @ p["fc2_w"].T + p["fc2_b"])
    return jax.nn.sigmoid(h2 @ p["fc3_w"].T + p["fc3_b"])


# TODO(synk): training path (fit() with Adagrad) is not implemented -- forward only.

if __name__ == "__main__":
    key = jax.random.PRNGKey(0)
    params = init_params(key)
    kparams = pack_params(params)

    # XOR-style inputs, batch of 4, 2 features each.
    x = jnp.array([[0.0, 0.0],
                   [0.0, 1.0],
                   [1.0, 0.0],
                   [1.0, 1.0]], dtype=jnp.float32)

    out = xor_net_forward(x, kparams)
    out = jax.block_until_ready(out)
    ref = _reference_forward(x, params)
    assert out.shape == (4, 1)
    assert jnp.allclose(out, ref, atol=1e-5, rtol=1e-5), (out, ref)

    # Exercise the batch grid + tail padding path (B not a multiple of the tile).
    x2 = jax.random.uniform(jax.random.PRNGKey(1), (300, 2), jnp.float32)
    out2 = jax.block_until_ready(xor_net_forward(x2, kparams, tile_b=128))
    ref2 = _reference_forward(x2, params)
    assert out2.shape == (300, 1)
    assert jnp.allclose(out2, ref2, atol=1e-5, rtol=1e-5)

    print("KERNEL_OK")
</pallas_src>

<mosaic_0001>
module attributes {stable_mosaic.version = 11 : i64} {
  func.func @_mlp_kernel(%arg0: i32, %arg1: memref<2x128xf32, #tpu.memory_space<vmem>>, %arg2: memref<10x1xf32, #tpu.memory_space<vmem>>, %arg3: memref<10x1xf32, #tpu.memory_space<vmem>>, %arg4: memref<10x1xf32, #tpu.memory_space<vmem>>, %arg5: memref<10x10xf32, #tpu.memory_space<vmem>>, %arg6: memref<10x1xf32, #tpu.memory_space<vmem>>, %arg7: memref<10x1xf32, #tpu.memory_space<vmem>>, %arg8: memref<1x1xf32, #tpu.memory_space<vmem>>, %arg9: memref<1x128xf32, #tpu.memory_space<vmem>>) attributes {dimension_semantics = [#tpu.dimension_semantics<parallel>], iteration_bounds = array<i64: 1>, scalar_prefetch = 0 : i64, scratch_operands = 0 : i64, tpu.core_type = #tpu.core_type<tc>, window_params = [{transform_indices = @transform_0, window_bounds = array<i64: 2, 128>}, {pipeline_mode = #tpu.pipeline_mode<synchronous>, transform_indices = @transform_1, window_bounds = array<i64: 10, 1>}, {pipeline_mode = #tpu.pipeline_mode<synchronous>, transform_indices = @transform_2, window_bounds = array<i64: 10, 1>}, {pipeline_mode = #tpu.pipeline_mode<synchronous>, transform_indices = @transform_3, window_bounds = array<i64: 10, 1>}, {pipeline_mode = #tpu.pipeline_mode<synchronous>, transform_indices = @transform_4, window_bounds = array<i64: 10, 10>}, {pipeline_mode = #tpu.pipeline_mode<synchronous>, transform_indices = @transform_5, window_bounds = array<i64: 10, 1>}, {pipeline_mode = #tpu.pipeline_mode<synchronous>, transform_indices = @transform_6, window_bounds = array<i64: 10, 1>}, {pipeline_mode = #tpu.pipeline_mode<synchronous>, transform_indices = @transform_7, window_bounds = array<i64: 1, 1>}, {transform_indices = @transform_8, window_bounds = array<i64: 1, 128>}]} {
    %c0 = arith.constant 0 : index
    %c0_0 = arith.constant 0 : index
    %0 = vector.load %arg1[%c0, %c0_0] : memref<2x128xf32, #tpu.memory_space<vmem>>, vector<2x128xf32>
    %1 = vector.extract_strided_slice %0 {offsets = [0, 0], sizes = [1, 128], strides = [1, 1]} : vector<2x128xf32> to vector<1x128xf32>
    %2 = vector.extract_strided_slice %0 {offsets = [1, 0], sizes = [1, 128], strides = [1, 1]} : vector<2x128xf32> to vector<1x128xf32>
    %c0_1 = arith.constant 0 : index
    %c0_2 = arith.constant 0 : index
    %3 = vector.load %arg2[%c0_1, %c0_2] : memref<10x1xf32, #tpu.memory_space<vmem>>, vector<10x1xf32>
    %4 = vector.broadcast %3 : vector<10x1xf32> to vector<10x128xf32>
    %5 = vector.broadcast %1 : vector<1x128xf32> to vector<10x128xf32>
    %6 = arith.mulf %4, %5 : vector<10x128xf32>
    %c0_3 = arith.constant 0 : index
    %c0_4 = arith.constant 0 : index
    %7 = vector.load %arg3[%c0_3, %c0_4] : memref<10x1xf32, #tpu.memory_space<vmem>>, vector<10x1xf32>
    %8 = vector.broadcast %7 : vector<10x1xf32> to vector<10x128xf32>
    %9 = vector.broadcast %2 : vector<1x128xf32> to vector<10x128xf32>
    %10 = arith.mulf %8, %9 : vector<10x128xf32>
    %11 = arith.addf %6, %10 : vector<10x128xf32>
    %c0_5 = arith.constant 0 : index
    %c0_6 = arith.constant 0 : index
    %12 = vector.load %arg4[%c0_5, %c0_6] : memref<10x1xf32, #tpu.memory_space<vmem>>, vector<10x1xf32>
    %13 = vector.broadcast %12 : vector<10x1xf32> to vector<10x128xf32>
    %14 = arith.addf %11, %13 : vector<10x128xf32>
    %cst = arith.constant 0.000000e+00 : f32
    %15 = vector.broadcast %cst : f32 to vector<10x128xf32>
    %16 = arith.maximumf %14, %15 : vector<10x128xf32>
    %c0_7 = arith.constant 0 : index
    %c0_8 = arith.constant 0 : index
    %17 = vector.load %arg5[%c0_7, %c0_8] : memref<10x10xf32, #tpu.memory_space<vmem>>, vector<10x10xf32>
    %cst_9 = arith.constant dense<0.000000e+00> : vector<10x128xf32>
    %18 = tpu.matmul %17, %16, %cst_9 {dimension_numbers = #tpu.dot_dimension_numbers<[1], [0], [0], [1], [0, 0, 1, 1], [], []>} : vector<10x10xf32>, vector<10x128xf32>, vector<10x128xf32> -> vector<10x128xf32>
    %c0_10 = arith.constant 0 : index
    %c0_11 = arith.constant 0 : index
    %19 = vector.load %arg6[%c0_10, %c0_11] : memref<10x1xf32, #tpu.memory_space<vmem>>, vector<10x1xf32>
    %20 = vector.broadcast %19 : vector<10x1xf32> to vector<10x128xf32>
    %21 = arith.addf %18, %20 : vector<10x128xf32>
    %cst_12 = arith.constant 5.000000e-01 : f32
    %22 = vector.broadcast %cst_12 : f32 to vector<10x128xf32>
    %23 = arith.mulf %22, %21 : vector<10x128xf32>
    %24 = math.tanh %23 : vector<10x128xf32>
    %cst_13 = arith.constant 5.000000e-01 : f32
    %25 = vector.broadcast %cst_13 : f32 to vector<10x128xf32>
    %26 = arith.mulf %25, %24 : vector<10x128xf32>
    %cst_14 = arith.constant 5.000000e-01 : f32
    %27 = vector.broadcast %cst_14 : f32 to vector<10x128xf32>
    %28 = arith.addf %26, %27 : vector<10x128xf32>
    %c0_15 = arith.constant 0 : index
    %c0_16 = arith.constant 0 : index
    %29 = vector.load %arg7[%c0_15, %c0_16] : memref<10x1xf32, #tpu.memory_space<vmem>>, vector<10x1xf32>
    %30 = vector.broadcast %29 : vector<10x1xf32> to vector<10x128xf32>
    %31 = arith.mulf %30, %28 : vector<10x128xf32>
    %cst_17 = arith.constant dense<0.000000e+00> : vector<128xf32>
    %32 = vector.multi_reduction <add>, %31, %cst_17 [0] : vector<10x128xf32> to vector<128xf32>
    %33 = vector.shape_cast %32 : vector<128xf32> to vector<1x128xf32>
    %c0_18 = arith.constant 0 : index
    %c0_19 = arith.constant 0 : index
    %34 = vector.load %arg8[%c0_18, %c0_19] : memref<1x1xf32, #tpu.memory_space<vmem>>, vector<1x1xf32>
    %35 = vector.broadcast %34 : vector<1x1xf32> to vector<1x128xf32>
    %36 = arith.addf %33, %35 : vector<1x128xf32>
    %cst_20 = arith.constant 5.000000e-01 : f32
    %37 = vector.broadcast %cst_20 : f32 to vector<1x128xf32>
    %38 = arith.mulf %37, %36 : vector<1x128xf32>
    %39 = math.tanh %38 : vector<1x128xf32>
    %cst_21 = arith.constant 5.000000e-01 : f32
    %40 = vector.broadcast %cst_21 : f32 to vector<1x128xf32>
    %41 = arith.mulf %40, %39 : vector<1x128xf32>
    %cst_22 = arith.constant 5.000000e-01 : f32
    %42 = vector.broadcast %cst_22 : f32 to vector<1x128xf32>
    %43 = arith.addf %41, %42 : vector<1x128xf32>
    %c0_23 = arith.constant 0 : index
    %c0_24 = arith.constant 0 : index
    %44 = vector.load %arg9[%c0_23, %c0_24] : memref<1x128xf32, #tpu.memory_space<vmem>>, vector<1x128xf32>
    tpu.vector_store %arg9[%c0_23, %c0_24], %43 {strides = array<i32>} : memref<1x128xf32, #tpu.memory_space<vmem>>, vector<1x128xf32>,
    return
  }
  func.func @transform_0(%arg0: i32) -> (i32, i32) {
    %c0_i32 = arith.constant 0 : i32
    %c0_i32_0 = arith.constant 0 : i32
    return %c0_i32, %arg0 : i32, i32
  }
  func.func @transform_1(%arg0: i32) -> (i32, i32) {
    %c0_i32 = arith.constant 0 : i32
    %c0_i32_0 = arith.constant 0 : i32
    %c0_i32_1 = arith.constant 0 : i32
    return %c0_i32, %c0_i32_0 : i32, i32
  }
  func.func @transform_2(%arg0: i32) -> (i32, i32) {
    %c0_i32 = arith.constant 0 : i32
    %c0_i32_0 = arith.constant 0 : i32
    %c0_i32_1 = arith.constant 0 : i32
    return %c0_i32, %c0_i32_0 : i32, i32
  }
  func.func @transform_3(%arg0: i32) -> (i32, i32) {
    %c0_i32 = arith.constant 0 : i32
    %c0_i32_0 = arith.constant 0 : i32
    %c0_i32_1 = arith.constant 0 : i32
    return %c0_i32, %c0_i32_0 : i32, i32
  }
  func.func @transform_4(%arg0: i32) -> (i32, i32) {
    %c0_i32 = arith.constant 0 : i32
    %c0_i32_0 = arith.constant 0 : i32
    %c0_i32_1 = arith.constant 0 : i32
    return %c0_i32, %c0_i32_0 : i32, i32
  }
  func.func @transform_5(%arg0: i32) -> (i32, i32) {
    %c0_i32 = arith.constant 0 : i32
    %c0_i32_0 = arith.constant 0 : i32
    %c0_i32_1 = arith.constant 0 : i32
    return %c0_i32, %c0_i32_0 : i32, i32
  }
  func.func @transform_6(%arg0: i32) -> (i32, i32) {
    %c0_i32 = arith.constant 0 : i32
    %c0_i32_0 = arith.constant 0 : i32
    %c0_i32_1 = arith.constant 0 : i32
    return %c0_i32, %c0_i32_0 : i32, i32
  }
  func.func @transform_7(%arg0: i32) -> (i32, i32) {
    %c0_i32 = arith.constant 0 : i32
    %c0_i32_0 = arith.constant 0 : i32
    %c0_i32_1 = arith.constant 0 : i32
    return %c0_i32, %c0_i32_0 : i32, i32
  }
  func.func @transform_8(%arg0: i32) -> (i32, i32) {
    %c0_i32 = arith.constant 0 : i32
    %c0_i32_0 = arith.constant 0 : i32
    return %c0_i32, %arg0 : i32, i32
  }
}

</mosaic_0001>

<llo_original>
// kernel: tpu_custom_call.1
$region0: #{tpu_custom_call.1}
  #allocation0 [shape = 'u32[]', space=smem, size = 0x4, offset = 0x4, fixed_abs, tag = 'smem constant byte address 0x4 - core index']
  #allocation1 [shape = 'u32[144,128]{1,0:T(1,128)}', space=vmem, size = 0x12000, scoped, tag = 'internal scratch']
  #allocation2 [shape = 'f32[1,1]{1,0:T(1,128)S(1)}', space=vmem, size = 0x200, scoped, tag = 'scoped memory for tpu_custom_call.1']
  %s0 = inlined_call_operand.vmem [shape: f32[2,128], index: 0, kind: input, shape index: {}]
  %s1 = inlined_call_operand.vmem [shape: f32[10,1], index: 1, kind: input, shape index: {}]
  %s2 = inlined_call_operand.vmem [shape: f32[10,1], index: 2, kind: input, shape index: {}]
  %s3 = inlined_call_operand.vmem [shape: f32[10,1], index: 3, kind: input, shape index: {}]
  %s4 = inlined_call_operand.vmem [shape: f32[10,10], index: 4, kind: input, shape index: {}]
  %s5 = inlined_call_operand.vmem [shape: f32[10,1], index: 5, kind: input, shape index: {}]
  %s6 = inlined_call_operand.vmem [shape: f32[10,1], index: 6, kind: input, shape index: {}]
  %s7 = inlined_call_operand.<no memory space> [shape: f32[1,1], index: 7, kind: input, shape index: {}]
  %s8 = inlined_call_operand.hbm [shape: f32[1,128], index: 8, kind: output, shape index: {}]
  %s9 = sld [smem:[#allocation0]]
  $region42: #{tpu_custom_call.1} parent=0
    _
  %s11 = ssub.s32 1, %s9
  %s12 = scalar_select 0, %s11, %s9
  %v13 = vstv %s7
  %14 = vst [vmem:[#allocation2] sm:$0x1] %v13
  $region1: #{tpu_custom_call.1} parent=0
    #allocation3 [shape = 'u8[512]{0}', space=vmem, size = 0x400, scoped, tag = 'output window, operand 0, single buffered']
    #allocation4 [shape = 's32[1]{0}', space=sflag, size = 0x4, scoped, tag = 'scoped memory for tpu_custom_call.1']
    %15 = vsyncpa [#allocation4], 0
    // Predicated region
    $region2: #{tpu_custom_call.1} parent=1 // pred_check
      _
    $region3: #{tpu_custom_call.1} parent=1 // pred_check_branch
      %17 = sbr.rel (0) target = $region5
    $region4: #{tpu_custom_call.1} parent=1 // pred_region
      _
    $region5: #{tpu_custom_call.1} parent=1 // pred_fallthru
      _
    // Predicated region
    $region6: #{tpu_custom_call.1} parent=1 // pred_check
      _
    $region7: #{tpu_custom_call.1} parent=1 // pred_check_branch
      %19 = sbr.rel (0) target = $region9
    $region8: #{tpu_custom_call.1} parent=1 // pred_region
      _
    $region9: #{tpu_custom_call.1} parent=1 // pred_fallthru
      _
    // Predicated region
    $region10: #{tpu_custom_call.1} parent=1 // pred_check
      _
    $region11: #{tpu_custom_call.1} parent=1 // pred_check_branch
      %21 = sbr.rel (0) target = $region13
    $region12: #{tpu_custom_call.1} parent=1 // pred_region
      _
    $region13: #{tpu_custom_call.1} parent=1 // pred_fallthru
      _
    // Predicated region
    $region14: #{tpu_custom_call.1} parent=1 // pred_check
      _
    $region15: #{tpu_custom_call.1} parent=1 // pred_check_branch
      %23 = sbr.rel (0) target = $region17
    $region16: #{tpu_custom_call.1} parent=1 // pred_region
      _
    $region17: #{tpu_custom_call.1} parent=1 // pred_fallthru
      _
    // Predicated region
    $region18: #{tpu_custom_call.1} parent=1 // pred_check
      _
    $region19: #{tpu_custom_call.1} parent=1 // pred_check_branch
      %25 = sbr.rel (0) target = $region21
    $region20: #{tpu_custom_call.1} parent=1 // pred_region
      _
    $region21: #{tpu_custom_call.1} parent=1 // pred_fallthru
      _
    // Predicated region
    $region22: #{tpu_custom_call.1} parent=1 // pred_check
      _
    $region23: #{tpu_custom_call.1} parent=1 // pred_check_branch
      %27 = sbr.rel (0) target = $region25
    $region24: #{tpu_custom_call.1} parent=1 // pred_region
      _
    $region25: #{tpu_custom_call.1} parent=1 // pred_fallthru
      _
    // Predicated region
    $region26: #{tpu_custom_call.1} parent=1 // pred_check
      _
    $region27: #{tpu_custom_call.1} parent=1 // pred_check_branch
      %29 = sbr.rel (0) target = $region29
    $region28: #{tpu_custom_call.1} parent=1 // pred_region
      _
    $region29: #{tpu_custom_call.1} parent=1 // pred_fallthru
      _
    // Predicated region
    $region30: #{tpu_custom_call.1} parent=1 // pred_check
      _
    $region31: #{tpu_custom_call.1} parent=1 // pred_check_branch
      %31 = sbr.rel (0) target = $region33
    $region32: #{tpu_custom_call.1} parent=1 // pred_region
      _
    $region33: #{tpu_custom_call.1} parent=1 // pred_fallthru
      _
    %v32 = vld [vmem:[%s0] sm:$0x3]
    %v33 = vld [vmem:[%s1] sm:$0xff]
    %v34 = vld [vmem:[%s1 + $0x8] sm:$0x3]
    %36 = vset.pattern.permute.xlu0 0
    %37 = vperm.xlu0 %36, %v33
    %v38 = vpop.permute.xlu0 %37
    %41 = vset.pattern.permute.xlu0 0
    %42 = vperm.xlu0 %41, %v34
    %v43 = vpop.permute.xlu0 %42
    %v45 = vlaneseq
    %v46 = vshrl.u32 %v45, 7
    %v47 = vsub.s32 0, %v46
    %v48 = vrot.slane %v32, %v47
    %v49 = vmul.f32 %v38, %v48
    %v50 = vmul.f32 %v43, %v48
    %v51 = vld [vmem:[%s2] sm:$0xff]
    %v52 = vld [vmem:[%s2 + $0x8] sm:$0x3]
    %54 = vset.pattern.permute.xlu0 0
    %55 = vperm.xlu0 %54, %v51
    %v56 = vpop.permute.xlu0 %55
    %59 = vset.pattern.permute.xlu0 0
    %60 = vperm.xlu0 %59, %v52
    %v61 = vpop.permute.xlu0 %60
    %v63 = vlaneseq
    %v64 = vshrl.u32 %v63, 7
    %v65 = vsub.s32 1, %v64
    %v66 = vrot.slane %v32, %v65
    %v67 = vmul.f32 %v56, %v66
    %v68 = vmul.f32 %v61, %v66
    %v69 = vadd.f32 %v49, %v67
    %v70 = vadd.f32 %v50, %v68
    %v71 = vld [vmem:[%s3] sm:$0xff]
    %v72 = vld [vmem:[%s3 + $0x8] sm:$0x3]
    %74 = vset.pattern.permute.xlu0 0
    %75 = vperm.xlu0 %74, %v71
    %v76 = vpop.permute.xlu0 %75
    %79 = vset.pattern.permute.xlu0 0
    %80 = vperm.xlu0 %79, %v72
    %v81 = vpop.permute.xlu0 %80
    %v83 = vadd.f32 %v69, %v76
    %v84 = vadd.f32 %v70, %v81
    %v85 = vmax.f32 %v83, 0.0
    %v86 = vmax.f32 %v84, 0.0
    %v87 = vld [vmem:[%s4] sm:$0xff]
    %v88 = vld [vmem:[%s4 + $0x8] sm:$0x3]
    %v89 = vld [vmem:[%s5] sm:$0xff]
    %v90 = vld [vmem:[%s5 + $0x8] sm:$0x3]
    %92 = vset.pattern.permute.xlu0 0
    %93 = vperm.xlu0 %92, %v89
    %v94 = vpop.permute.xlu0 %93
    %97 = vset.pattern.permute.xlu0 0
    %98 = vperm.xlu0 %97, %v90
    %v99 = vpop.permute.xlu0 %98
    %vm101 = vcmask 80896
    %v103 = vsel %vm101, %v87, 0
    %v106 = vsel %vm101, %v88, 0
    %vm108 = vcmask 1041408
    %v110 = vsel %vm108, %v86, 0
    %112 = vmatprep.subr.mxu0 0.0
    %113 = vmatpush1.msra.mxu0 %v85
    %114 = vmatprep.subr.mxu0 0.0
    %115 = vmatpush1.msra.mxu0 %v110
    %116 = vmatprep.subr.mxu0 0.0
    %117 = vmatpush1.msra.mxu0 0.0
    %118 = vmatprep.subr.mxu0 0.0
    %119 = vmatpush1.msra.mxu0 0.0
    %120 = vmatprep.subr.mxu0 0.0
    %121 = vmatpush1.msra.mxu0 0.0
    %122 = vmatprep.subr.mxu0 0.0
    %123 = vmatpush1.msra.mxu0 0.0
    %124 = vmatprep.subr.mxu0 0.0
    %125 = vmatpush1.msra.mxu0 0.0
    %126 = vmatprep.subr.mxu0 0.0
    %127 = vmatpush1.msra.mxu0 0.0
    %128 = vmatprep.subr.mxu0 0.0
    %129 = vmatpush1.msra.mxu0 0.0
    %130 = vmatprep.subr.mxu0 0.0
    %131 = vmatpush1.msra.mxu0 0.0
    %132 = vmatprep.subr.mxu0 0.0
    %133 = vmatpush1.msra.mxu0 0.0
    %134 = vmatprep.subr.mxu0 0.0
    %135 = vmatpush1.msra.mxu0 0.0
    %136 = vmatprep.subr.mxu0 0.0
    %137 = vmatpush1.msra.mxu0 0.0
    %138 = vmatprep.subr.mxu0 0.0
    %139 = vmatpush1.msra.mxu0 0.0
    %140 = vmatprep.subr.mxu0 0.0
    %141 = vmatpush1.msra.mxu0 0.0
    %142 = vmatprep.subr.mxu0 0.0
    %143 = vmatpush1.msra.mxu0 0.0
    %144 = vmatprep.subr.mxu0 0.0
    %145 = vmatpush1.msra.mxu0 0.0
    %146 = vmatprep.subr.mxu0 0.0
    %147 = vmatpush1.msra.mxu0 0.0
    %148 = vmatprep.subr.mxu0 0.0
    %149 = vmatpush1.msra.mxu0 0.0
    %150 = vmatprep.subr.mxu0 0.0
    %151 = vmatpush1.msra.mxu0 0.0
    %152 = vmatprep.subr.mxu0 0.0
    %153 = vmatpush1.msra.mxu0 0.0
    %154 = vmatprep.subr.mxu0 0.0
    %155 = vmatpush1.msra.mxu0 0.0
    %156 = vmatprep.subr.mxu0 0.0
    %157 = vmatpush1.msra.mxu0 0.0
    %158 = vmatprep.subr.mxu0 0.0
    %159 = vmatpush1.msra.mxu0 0.0
    %160 = vmatprep.subr.mxu0 0.0
    %161 = vmatpush1.msra.mxu0 0.0
    %162 = vmatprep.subr.mxu0 0.0
    %163 = vmatpush1.msra.mxu0 0.0
    %164 = vmatprep.subr.mxu0 0.0
    %165 = vmatpush1.msra.mxu0 0.0
    %166 = vmatprep.subr.mxu0 0.0
    %167 = vmatpush1.msra.mxu0 0.0
    %168 = vmatprep.subr.mxu0 0.0
    %169 = vmatpush1.msra.mxu0 0.0
    %170 = vmatprep.subr.mxu0 0.0
    %171 = vmatpush1.msra.mxu0 0.0
    %172 = vmatprep.subr.mxu0 0.0
    %173 = vmatpush1.msra.mxu0 0.0
    %174 = vmatprep.subr.mxu0 0.0
    %175 = vmatpush1.msra.mxu0 0.0
    %176 = vmatprep.mubr.f32.mxu0 0.0
    %177 = vmatmul.mubr.f32.gmra.mrb[0].mxu0 %v103
    %v178 = vpop.f32.mrb[0].mxu0
    %v179 = vadd.f32 %v94, %v178
    %v180 = vpop.f32.mrb[0].mxu0
    %181 = vmatprep.mubr.f32.mxu0 0.0
    %182 = vmatmul.mubr.f32.gmra.mrb[0].mxu0 %v106
    %v183 = vpop.f32.mrb[0].mxu0
    %v184 = vadd.f32 %v99, %v183
    %v185 = vpop.f32.mrb[0].mxu0
    %186 = vdwg.mxu0
    %v187 = vmul.f32 %v179, 0.5
    %v188 = vmul.f32 %v184, 0.5
    %v189 = vtanh.pop %v187
    %v190 = vtanh.pop %v188
    %v191 = vmul.f32 %v189, 0.5
    %v192 = vmul.f32 %v190, 0.5
    %v193 = vadd.f32 %v191, 0.5
    %v194 = vadd.f32 %v192, 0.5
    %v195 = vld [vmem:[%s6] sm:$0xff]
    %v196 = vld [vmem:[%s6 + $0x8] sm:$0x3]
    %198 = vset.pattern.permute.xlu0 0
    %199 = vperm.xlu0 %198, %v195
    %v200 = vpop.permute.xlu0 %199
    %203 = vset.pattern.permute.xlu0 0
    %204 = vperm.xlu0 %203, %v196
    %v205 = vpop.permute.xlu0 %204
    %v207 = vmul.f32 %v200, %v193
    %v208 = vmul.f32 %v205, %v194
    %v209 = vsel %vm108, %v208, 0.0
    %v210 = vadd.f32 %v207, %v209
    %v211 = vrot.slane %v210, 4
    %v212 = vadd.f32 %v210, %v211
    %v213 = vrot.slane %v212, 2
    %v214 = vadd.f32 %v212, %v213
    %v215 = vrot.slane %v214, 1
    %v216 = vadd.f32 %v214, %v215
    %v217 = vld [vmem:[#allocation2] sm:$0x1]
    %219 = vset.pattern.permute.xlu0 0
    %220 = vperm.xlu0 %219, %v217
    %v221 = vpop.permute.xlu0 %220
    %v223 = vlaneseq
    %v224 = vshrl.u32 %v223, 7
    %v225 = vsub.s32 0, %v224
    %v226 = vrot.slane %v221, %v225
    %v227 = vadd.f32 %v216, %v226
    %v228 = vmul.f32 %v227, 0.5
    %v229 = vtanh.pop %v228
    %v230 = vmul.f32 %v229, 0.5
    %v231 = vadd.f32 %v230, 0.5
    %232 = vst [vmem:[#allocation3] sm:$0x1] %v231
    // Predicated region
    $region34: #{tpu_custom_call.1} parent=1 // pred_check
      _
    $region35: #{tpu_custom_call.1} parent=1 // pred_check_branch
      %234 = sbr.rel (0) target = $region37
    $region36: #{tpu_custom_call.1} parent=1 // pred_region
      %s236 = ssub.s32 16, 16
      %237 = vsyncadd [#allocation4], %s236
      %s239 = sshll.u32 [#allocation3], 4
      %s240 = int_to_ptr.vmem [resolvable:$true] %s239
      %242 = dma.vmem_to_hbm [thread:$0]  %s240, 16, %s8, [#allocation4]
    $region37: #{tpu_custom_call.1} parent=1 // pred_fallthru
      _
    // Predicated region
    $region38: #{tpu_custom_call.1} parent=1 // pred_check
      _
    $region39: #{tpu_custom_call.1} parent=1 // pred_check_branch
      %244 = sbr.rel (0) target = $region41
    $region40: #{tpu_custom_call.1} parent=1 // pred_region
      %245 = dma.done [#allocation4], 16
    $region41: #{tpu_custom_call.1} parent=1 // pred_fallthru
      _
    %246 = vsyncpa [#allocation4], 1

</llo_original>
